<compile_context>
chip_gen: v7x
topology: tpu7x:2x2x1
jax: 0.10.0
libtpu: 0.0.40
codegen_flags: <defaults>
</compile_context>

<pallas_src>
import jax
import jax.numpy as jnp
from jax.experimental import pallas as pl
from jax.experimental.pallas import tpu as pltpu

ALPHA = 2
BETA = 4

LANES = 128
ACC_SUBLANES = 8
MAX_BLOCK_ROWS = 4096   # (4096,128) f32 block = 2 MiB; 2 inputs x 2 bufs = 8 MiB


def _round_up(x, m):
    return (x + m - 1) // m * m


def _default_n_cores():
    # 2 TensorCore shards on multi-TC chips (v7x, v4/v5p megacore); 1 on
    # single-TC v5e/v6e. The split is a harmless serial loop if detection is
    # wrong, so fall back to 2.
    try:
        kind = jax.devices()[0].device_kind.lower()
    except Exception:
        return 2
    if ("v5 lite" in kind or "v5e" in kind or "v6 lite" in kind
            or "v6e" in kind):
        return 1
    return 2


def _focal_loss_kernel(nrows_ref, pred_ref, tgt_ref,
                       pos_ref, neg_ref, npos_ref):
    c = pl.program_id(0)              # megacore shard
    j = pl.program_id(1)              # sequential reduction step within shard
    steps_per_core = pl.num_programs(1)

    @pl.when(j == 0)
    def _():
        pos_ref[...] = jnp.zeros_like(pos_ref)
        neg_ref[...] = jnp.zeros_like(neg_ref)
        npos_ref[...] = jnp.zeros_like(npos_ref)

    block_rows = pred_ref.shape[0]
    # int32 row arithmetic: fine below ~2^31 rows (~2.7e11 elements).
    row0 = (c * steps_per_core + j) * block_rows
    rows_left = nrows_ref[0] - row0   # valid rows from this block onwards

    def fold(x):
        # (block_rows,128) -> (block_rows/8,8,128) is (8,128)-tile aligned, so
        # the reshape is free; the axis-0 sum is a chain of in-register vreg
        # adds on the VALU (no cross-lane XLU traffic in the hot loop).
        return x.reshape(-1, ACC_SUBLANES, LANES).sum(axis=0, keepdims=True)

    def accumulate(valid):
        p = pred_ref[...].astype(jnp.float32)
        t = tgt_ref[...].astype(jnp.float32)
        is_pos = t == 1.0
        is_neg = t < 1.0
        if valid is not None:
            is_pos = jnp.logical_and(is_pos, valid)
            is_neg = jnp.logical_and(is_neg, valid)
        one_m_p = 1.0 - p
        # Branches are mutually exclusive -> one shared log (1 EUP op/element).
        logv = jnp.log(jnp.where(is_pos, p, one_m_p))
        p2 = p * p                    # p^alpha,      alpha = 2
        omp2 = one_m_p * one_m_p      # (1-p)^alpha
        one_m_t = 1.0 - t
        omt2 = one_m_t * one_m_t
        neg_w = omt2 * omt2           # (1-t)^beta,   beta = 4
        # Selects instead of float-mask multiplies (fewer VALU ops/element).
        pos_loss = jnp.where(is_pos, logv * omp2, 0.0)
        neg_loss = jnp.where(is_neg, logv * p2 * neg_w, 0.0)
        pos_cnt = jnp.where(is_pos, 1.0, 0.0)
        pos_ref[...] += fold(pos_loss)
        neg_ref[...] += fold(neg_loss)
        npos_ref[...] += fold(pos_cnt)

    # Fast path: block fully in range -> no iota / masking work at all.
    @pl.when(rows_left >= block_rows)
    def _():
        accumulate(None)

    # Slow path: partial last block (or stale rows of an over-sized single
    # block) -> row-granular masking. Runs for at most one block per shard.
    @pl.when(jnp.logical_and(rows_left > 0, rows_left < block_rows))
    def _():
        row_ids = jax.lax.broadcasted_iota(jnp.int32, pred_ref.shape, 0)
        accumulate(row_ids < rows_left)

    # rows_left <= 0: fully out-of-range clamped block -> skip entirely.


def _partial_sums(prediction, target):
    """Plain-JAX partial sums (used for the <128-element ragged tail)."""
    p = prediction.astype(jnp.float32)
    t = target.astype(jnp.float32)
    is_pos = t == 1.0
    is_neg = t < 1.0
    one_m_p = 1.0 - p
    logv = jnp.log(jnp.where(is_pos, p, one_m_p))
    neg_w = (1.0 - t) ** BETA
    pos_sum = jnp.sum(jnp.where(is_pos, logv * one_m_p * one_m_p, 0.0))
    neg_sum = jnp.sum(jnp.where(is_neg, logv * p * p * neg_w, 0.0))
    num_pos = jnp.sum(is_pos.astype(jnp.float32))
    return pos_sum, neg_sum, num_pos


def _combine(pos_sum, neg_sum, num_pos):
    safe_den = jnp.where(num_pos == 0, 1.0, num_pos)
    return jnp.where(num_pos == 0, -neg_sum, -(pos_sum + neg_sum) / safe_den)


def focal_loss(prediction, target, *, n_cores=None, block_rows=None,
               interpret=False):
    """FocalLoss(alpha=2, beta=4) forward, any input shape / dtype."""
    if n_cores is None:
        n_cores = _default_n_cores()

    pred = prediction.reshape(-1)
    tgt = target.reshape(-1)
    n = pred.shape[0]
    tail = n % LANES
    main = n - tail

    tail_sums = None
    if tail:
        # Fold the <128-element ragged tail in plain JAX instead of padding
        # (a concatenate pad re-materializes BOTH full inputs in HBM).
        tail_sums = _partial_sums(pred[main:], tgt[main:])
        # TODO(synk): for 128-misaligned numel the prefix slice below may still
        # materialize a copy of the main part; a 1-D-blocked kernel would
        # avoid even that.
        pred = pred[:main]
        tgt = tgt[:main]

    if main == 0:
        return _combine(*tail_sums)

    rows = main // LANES
    pred2 = pred.reshape(rows, LANES)
    tgt2 = tgt.reshape(rows, LANES)

    if block_rows is None:
        block_rows = MAX_BLOCK_ROWS
    block_rows = min(block_rows, _round_up(rows, ACC_SUBLANES))
    block_rows = _round_up(block_rows, ACC_SUBLANES)
    nblocks = pl.cdiv(rows, block_rows)
    n_cores = max(1, min(n_cores, nblocks))
    steps_per_core = pl.cdiv(nblocks, n_cores)
    last_block = nblocks - 1

    def in_map(c, j, nrows_ref):
        b = c * steps_per_core + j
        return (jnp.minimum(b, last_block), 0)   # clamp; kernel skips overflow

    in_spec = pl.BlockSpec((block_rows, LANES), in_map)
    acc_spec = pl.BlockSpec((1, ACC_SUBLANES, LANES),
                            lambda c, j, nrows_ref: (c, 0, 0))
    acc_shape = jax.ShapeDtypeStruct((n_cores, ACC_SUBLANES, LANES),
                                     jnp.float32)

    cost = pl.CostEstimate(
        flops=16 * main,
        transcendentals=main,
        bytes_accessed=main * (pred2.dtype.itemsize + tgt2.dtype.itemsize))

    nrows_arr = jnp.asarray([rows], dtype=jnp.int32)

    pos_p, neg_p, npos_p = pl.pallas_call(
        _focal_loss_kernel,
        out_shape=(acc_shape, acc_shape, acc_shape),
        grid_spec=pltpu.PrefetchScalarGridSpec(
            num_scalar_prefetch=1,
            grid=(n_cores, steps_per_core),
            in_specs=[in_spec, in_spec],
            out_specs=(acc_spec, acc_spec, acc_spec),
        ),
        compiler_params=pltpu.CompilerParams(
            dimension_semantics=("parallel", "arbitrary"),
            vmem_limit_bytes=64 * 1024 * 1024),
        cost_estimate=cost,
        interpret=interpret,
    )(nrows_arr, pred2, tgt2)

    # Tiny final collapse of the per-core (8,128) partials in plain JAX.
    pos_sum = jnp.sum(pos_p)
    neg_sum = jnp.sum(neg_p)
    num_pos = jnp.sum(npos_p)
    if tail_sums is not None:
        pos_sum = pos_sum + tail_sums[0]
        neg_sum = neg_sum + tail_sums[1]
        num_pos = num_pos + tail_sums[2]
    return _combine(pos_sum, neg_sum, num_pos)


def _focal_loss_ref(prediction, target):
    p = prediction.astype(jnp.float32)
    t = target.astype(jnp.float32)
    pos = (t == 1.0).astype(jnp.float32)
    neg = (t < 1.0).astype(jnp.float32)
    nw = (1.0 - t) ** BETA
    pl_ = jnp.sum(jnp.log(p) * (1.0 - p) ** ALPHA * pos)
    nl_ = jnp.sum(jnp.log(1.0 - p) * p ** ALPHA * nw * neg)
    npos = jnp.sum(pos)
    return jnp.where(npos == 0, -nl_,
                     -(pl_ + nl_) / jnp.where(npos == 0, 1.0, npos))


if __name__ == "__main__":
    key = jax.random.PRNGKey(0)
    ks = jax.random.split(key, 12)

    def make_inputs(kp, ku, kt, shape):
        pred = jax.nn.sigmoid(jax.random.normal(kp, shape, jnp.float32))
        u = jax.random.uniform(ku, shape, jnp.float32)
        tgt = jnp.where(u > 0.9, 1.0,
                        0.9 * jax.random.uniform(kt, shape, jnp.float32))
        return pred, tgt

    checks = []

    # 1) heatmap-like NCHW prediction/target as the module's FocalLoss sees them
    p1, t1 = make_inputs(ks[0], ks[1], ks[2], (2, 4, 16, 16))
    checks.append(("nchw", p1, t1, 1e-5, 1e-5))

    # 2) multi-grid-step case with a partial last block (4608 rows of 128)
    p2, t2 = make_inputs(ks[3], ks[4], ks[5], (1, 4, 384, 384))
    checks.append(("large", p2, t2, 1e-4, 1e-4))

    # 3) numel not 128-aligned: kernel main part + host-folded <128-elem tail
    p3, t3 = make_inputs(ks[6], ks[7], ks[8], (2053,))
    checks.append(("ragged", p3, t3, 1e-5, 1e-5))

    # 4) no positives -> exercises the num_pos == 0 branch
    p4 = jax.nn.sigmoid(jax.random.normal(ks[9], (2, 4, 16, 16), jnp.float32))
    t4 = 0.9 * jax.random.uniform(ks[10], (2, 4, 16, 16), jnp.float32)
    checks.append(("no_pos", p4, t4, 1e-5, 1e-5))

    for name, p, t, rtol, atol in checks:
        out = jax.block_until_ready(focal_loss(p, t))
        ref = _focal_loss_ref(p, t)
        assert jnp.isfinite(out), f"non-finite loss ({name})"
        assert jnp.allclose(out, ref, rtol=rtol, atol=atol), (name, out, ref)

    print("KERNEL_OK")
</pallas_src>

<mosaic_0001>
module attributes {stable_mosaic.version = 11 : i64} {
  func.func @_focal_loss_kernel(%arg0: i32, %arg1: i32, %arg2: memref<1xi32, #tpu.memory_space<smem>>, %arg3: memref<16x128xf32, #tpu.memory_space<vmem>>, %arg4: memref<16x128xf32, #tpu.memory_space<vmem>>, %arg5: memref<1x8x128xf32, #tpu.memory_space<vmem>>, %arg6: memref<1x8x128xf32, #tpu.memory_space<vmem>>, %arg7: memref<1x8x128xf32, #tpu.memory_space<vmem>>) attributes {dimension_semantics = [#tpu.dimension_semantics<parallel>, #tpu.dimension_semantics<arbitrary>], iteration_bounds = array<i64: 1, 1>, scalar_prefetch = 1 : i64, scratch_operands = 0 : i64, tpu.core_type = #tpu.core_type<tc>, window_params = [{transform_indices = @transform_0, window_bounds = array<i64: 16, 128>}, {transform_indices = @transform_1, window_bounds = array<i64: 16, 128>}, {transform_indices = @transform_2, window_bounds = array<i64: 1, 8, 128>}, {transform_indices = @transform_3, window_bounds = array<i64: 1, 8, 128>}, {transform_indices = @transform_4, window_bounds = array<i64: 1, 8, 128>}]} {
    %c0_i32 = arith.constant 0 : i32
    %0 = arith.cmpi eq, %arg1, %c0_i32 : i32
    %1 = arith.extui %0 : i1 to i32
    %c0_i32_0 = arith.constant 0 : i32
    %2 = arith.cmpi ne, %1, %c0_i32_0 : i32
    scf.if %2 {
      %cst = arith.constant 0.000000e+00 : f32
      %16 = vector.broadcast %cst : f32 to vector<1x8x128xf32>
      %c0_6 = arith.constant 0 : index
      %c0_7 = arith.constant 0 : index
      %c0_8 = arith.constant 0 : index
      %17 = vector.load %arg5[%c0_6, %c0_7, %c0_8] : memref<1x8x128xf32, #tpu.memory_space<vmem>>, vector<1x8x128xf32>
      tpu.vector_store %arg5[%c0_6, %c0_7, %c0_8], %16 {strides = array<i32>} : memref<1x8x128xf32, #tpu.memory_space<vmem>>, vector<1x8x128xf32>,
      %cst_9 = arith.constant 0.000000e+00 : f32
      %18 = vector.broadcast %cst_9 : f32 to vector<1x8x128xf32>
      %c0_10 = arith.constant 0 : index
      %c0_11 = arith.constant 0 : index
      %c0_12 = arith.constant 0 : index
      %19 = vector.load %arg6[%c0_10, %c0_11, %c0_12] : memref<1x8x128xf32, #tpu.memory_space<vmem>>, vector<1x8x128xf32>
      tpu.vector_store %arg6[%c0_10, %c0_11, %c0_12], %18 {strides = array<i32>} : memref<1x8x128xf32, #tpu.memory_space<vmem>>, vector<1x8x128xf32>,
      %cst_13 = arith.constant 0.000000e+00 : f32
      %20 = vector.broadcast %cst_13 : f32 to vector<1x8x128xf32>
      %c0_14 = arith.constant 0 : index
      %c0_15 = arith.constant 0 : index
      %c0_16 = arith.constant 0 : index
      %21 = vector.load %arg7[%c0_14, %c0_15, %c0_16] : memref<1x8x128xf32, #tpu.memory_space<vmem>>, vector<1x8x128xf32>
      tpu.vector_store %arg7[%c0_14, %c0_15, %c0_16], %20 {strides = array<i32>} : memref<1x8x128xf32, #tpu.memory_space<vmem>>, vector<1x8x128xf32>,
    } else {
    }
    %c1_i32 = arith.constant 1 : i32
    %3 = arith.muli %arg0, %c1_i32 : i32
    %4 = arith.addi %3, %arg1 : i32
    %c16_i32 = arith.constant 16 : i32
    %5 = arith.muli %4, %c16_i32 : i32
    %c0 = arith.constant 0 : index
    %6 = memref.load %arg2[%c0] : memref<1xi32, #tpu.memory_space<smem>>
    %7 = arith.subi %6, %5 : i32
    %c16_i32_1 = arith.constant 16 : i32
    %8 = arith.cmpi sge, %7, %c16_i32_1 : i32
    %9 = arith.extui %8 : i1 to i32
    %c0_i32_2 = arith.constant 0 : i32
    %10 = arith.cmpi ne, %9, %c0_i32_2 : i32
    scf.if %10 {
      %c0_6 = arith.constant 0 : index
      %c0_7 = arith.constant 0 : index
      %16 = vector.load %arg3[%c0_6, %c0_7] : memref<16x128xf32, #tpu.memory_space<vmem>>, vector<16x128xf32>
      %c0_8 = arith.constant 0 : index
      %c0_9 = arith.constant 0 : index
      %17 = vector.load %arg4[%c0_8, %c0_9] : memref<16x128xf32, #tpu.memory_space<vmem>>, vector<16x128xf32>
      %cst = arith.constant 1.000000e+00 : f32
      %18 = vector.broadcast %cst : f32 to vector<16x128xf32>
      %19 = arith.cmpf oeq, %17, %18 : vector<16x128xf32>
      %cst_10 = arith.constant 1.000000e+00 : f32
      %20 = vector.broadcast %cst_10 : f32 to vector<16x128xf32>
      %21 = arith.cmpf olt, %17, %20 : vector<16x128xf32>
      %cst_11 = arith.constant 1.000000e+00 : f32
      %22 = vector.broadcast %cst_11 : f32 to vector<16x128xf32>
      %23 = arith.subf %22, %16 : vector<16x128xf32>
      %24 = arith.select %19, %16, %23 : vector<16x128xi1>, vector<16x128xf32>
      %25 = math.log %24 : vector<16x128xf32>
      %26 = arith.mulf %16, %16 : vector<16x128xf32>
      %27 = arith.mulf %23, %23 : vector<16x128xf32>
      %cst_12 = arith.constant 1.000000e+00 : f32
      %28 = vector.broadcast %cst_12 : f32 to vector<16x128xf32>
      %29 = arith.subf %28, %17 : vector<16x128xf32>
      %30 = arith.mulf %29, %29 : vector<16x128xf32>
      %31 = arith.mulf %30, %30 : vector<16x128xf32>
      %32 = arith.mulf %25, %27 : vector<16x128xf32>
      %cst_13 = arith.constant 0.000000e+00 : f32
      %33 = vector.broadcast %cst_13 : f32 to vector<16x128xf32>
      %34 = arith.select %19, %32, %33 : vector<16x128xi1>, vector<16x128xf32>
      %35 = arith.mulf %25, %26 : vector<16x128xf32>
      %36 = arith.mulf %35, %31 : vector<16x128xf32>
      %cst_14 = arith.constant 0.000000e+00 : f32
      %37 = vector.broadcast %cst_14 : f32 to vector<16x128xf32>
      %38 = arith.select %21, %36, %37 : vector<16x128xi1>, vector<16x128xf32>
      %cst_15 = arith.constant 1.000000e+00 : f32
      %cst_16 = arith.constant 0.000000e+00 : f32
      %39 = vector.broadcast %cst_15 : f32 to vector<16x128xf32>
      %40 = vector.broadcast %cst_16 : f32 to vector<16x128xf32>
      %41 = arith.select %19, %39, %40 : vector<16x128xi1>, vector<16x128xf32>
      %c0_17 = arith.constant 0 : index
      %c0_18 = arith.constant 0 : index
      %c0_19 = arith.constant 0 : index
      %42 = vector.load %arg5[%c0_17, %c0_18, %c0_19] : memref<1x8x128xf32, #tpu.memory_space<vmem>>, vector<1x8x128xf32>
      %43 = vector.shape_cast %34 : vector<16x128xf32> to vector<2x8x128xf32>
      %cst_20 = arith.constant dense<0.000000e+00> : vector<8x128xf32>
      %44 = vector.multi_reduction <add>, %43, %cst_20 [0] : vector<2x8x128xf32> to vector<8x128xf32>
      %45 = vector.shape_cast %44 : vector<8x128xf32> to vector<1x8x128xf32>
      %46 = arith.addf %42, %45 : vector<1x8x128xf32>
      %c0_21 = arith.constant 0 : index
      %c0_22 = arith.constant 0 : index
      %c0_23 = arith.constant 0 : index
      %47 = vector.load %arg5[%c0_21, %c0_22, %c0_23] : memref<1x8x128xf32, #tpu.memory_space<vmem>>, vector<1x8x128xf32>
      tpu.vector_store %arg5[%c0_21, %c0_22, %c0_23], %46 {strides = array<i32>} : memref<1x8x128xf32, #tpu.memory_space<vmem>>, vector<1x8x128xf32>,
      %c0_24 = arith.constant 0 : index
      %c0_25 = arith.constant 0 : index
      %c0_26 = arith.constant 0 : index
      %48 = vector.load %arg6[%c0_24, %c0_25, %c0_26] : memref<1x8x128xf32, #tpu.memory_space<vmem>>, vector<1x8x128xf32>
      %49 = vector.shape_cast %38 : vector<16x128xf32> to vector<2x8x128xf32>
      %cst_27 = arith.constant dense<0.000000e+00> : vector<8x128xf32>
      %50 = vector.multi_reduction <add>, %49, %cst_27 [0] : vector<2x8x128xf32> to vector<8x128xf32>
      %51 = vector.shape_cast %50 : vector<8x128xf32> to vector<1x8x128xf32>
      %52 = arith.addf %48, %51 : vector<1x8x128xf32>
      %c0_28 = arith.constant 0 : index
      %c0_29 = arith.constant 0 : index
      %c0_30 = arith.constant 0 : index
      %53 = vector.load %arg6[%c0_28, %c0_29, %c0_30] : memref<1x8x128xf32, #tpu.memory_space<vmem>>, vector<1x8x128xf32>
      tpu.vector_store %arg6[%c0_28, %c0_29, %c0_30], %52 {strides = array<i32>} : memref<1x8x128xf32, #tpu.memory_space<vmem>>, vector<1x8x128xf32>,
      %c0_31 = arith.constant 0 : index
      %c0_32 = arith.constant 0 : index
      %c0_33 = arith.constant 0 : index
      %54 = vector.load %arg7[%c0_31, %c0_32, %c0_33] : memref<1x8x128xf32, #tpu.memory_space<vmem>>, vector<1x8x128xf32>
      %55 = vector.shape_cast %41 : vector<16x128xf32> to vector<2x8x128xf32>
      %cst_34 = arith.constant dense<0.000000e+00> : vector<8x128xf32>
      %56 = vector.multi_reduction <add>, %55, %cst_34 [0] : vector<2x8x128xf32> to vector<8x128xf32>
      %57 = vector.shape_cast %56 : vector<8x128xf32> to vector<1x8x128xf32>
      %58 = arith.addf %54, %57 : vector<1x8x128xf32>
      %c0_35 = arith.constant 0 : index
      %c0_36 = arith.constant 0 : index
      %c0_37 = arith.constant 0 : index
      %59 = vector.load %arg7[%c0_35, %c0_36, %c0_37] : memref<1x8x128xf32, #tpu.memory_space<vmem>>, vector<1x8x128xf32>
      tpu.vector_store %arg7[%c0_35, %c0_36, %c0_37], %58 {strides = array<i32>} : memref<1x8x128xf32, #tpu.memory_space<vmem>>, vector<1x8x128xf32>,
    } else {
    }
    %c0_i32_3 = arith.constant 0 : i32
    %11 = arith.cmpi sgt, %7, %c0_i32_3 : i32
    %c16_i32_4 = arith.constant 16 : i32
    %12 = arith.cmpi slt, %7, %c16_i32_4 : i32
    %13 = arith.andi %11, %12 : i1
    %14 = arith.extui %13 : i1 to i32
    %c0_i32_5 = arith.constant 0 : i32
    %15 = arith.cmpi ne, %14, %c0_i32_5 : i32
    scf.if %15 {
      %16 = tpu.iota {dimensions = array<i32: 0>} : vector<16x128xi32>
      %17 = vector.broadcast %7 : i32 to vector<16x128xi32>
      %18 = arith.cmpi slt, %16, %17 : vector<16x128xi32>
      %c0_6 = arith.constant 0 : index
      %c0_7 = arith.constant 0 : index
      %19 = vector.load %arg3[%c0_6, %c0_7] : memref<16x128xf32, #tpu.memory_space<vmem>>, vector<16x128xf32>
      %c0_8 = arith.constant 0 : index
      %c0_9 = arith.constant 0 : index
      %20 = vector.load %arg4[%c0_8, %c0_9] : memref<16x128xf32, #tpu.memory_space<vmem>>, vector<16x128xf32>
      %cst = arith.constant 1.000000e+00 : f32
      %21 = vector.broadcast %cst : f32 to vector<16x128xf32>
      %22 = arith.cmpf oeq, %20, %21 : vector<16x128xf32>
      %cst_10 = arith.constant 1.000000e+00 : f32
      %23 = vector.broadcast %cst_10 : f32 to vector<16x128xf32>
      %24 = arith.cmpf olt, %20, %23 : vector<16x128xf32>
      %25 = arith.andi %22, %18 : vector<16x128xi1>
      %26 = arith.andi %24, %18 : vector<16x128xi1>
      %cst_11 = arith.constant 1.000000e+00 : f32
      %27 = vector.broadcast %cst_11 : f32 to vector<16x128xf32>
      %28 = arith.subf %27, %19 : vector<16x128xf32>
      %29 = arith.select %25, %19, %28 : vector<16x128xi1>, vector<16x128xf32>
      %30 = math.log %29 : vector<16x128xf32>
      %31 = arith.mulf %19, %19 : vector<16x128xf32>
      %32 = arith.mulf %28, %28 : vector<16x128xf32>
      %cst_12 = arith.constant 1.000000e+00 : f32
      %33 = vector.broadcast %cst_12 : f32 to vector<16x128xf32>
      %34 = arith.subf %33, %20 : vector<16x128xf32>
      %35 = arith.mulf %34, %34 : vector<16x128xf32>
      %36 = arith.mulf %35, %35 : vector<16x128xf32>
      %37 = arith.mulf %30, %32 : vector<16x128xf32>
      %cst_13 = arith.constant 0.000000e+00 : f32
      %38 = vector.broadcast %cst_13 : f32 to vector<16x128xf32>
      %39 = arith.select %25, %37, %38 : vector<16x128xi1>, vector<16x128xf32>
      %40 = arith.mulf %30, %31 : vector<16x128xf32>
      %41 = arith.mulf %40, %36 : vector<16x128xf32>
      %cst_14 = arith.constant 0.000000e+00 : f32
      %42 = vector.broadcast %cst_14 : f32 to vector<16x128xf32>
      %43 = arith.select %26, %41, %42 : vector<16x128xi1>, vector<16x128xf32>
      %cst_15 = arith.constant 1.000000e+00 : f32
      %cst_16 = arith.constant 0.000000e+00 : f32
      %44 = vector.broadcast %cst_15 : f32 to vector<16x128xf32>
      %45 = vector.broadcast %cst_16 : f32 to vector<16x128xf32>
      %46 = arith.select %25, %44, %45 : vector<16x128xi1>, vector<16x128xf32>
      %c0_17 = arith.constant 0 : index
      %c0_18 = arith.constant 0 : index
      %c0_19 = arith.constant 0 : index
      %47 = vector.load %arg5[%c0_17, %c0_18, %c0_19] : memref<1x8x128xf32, #tpu.memory_space<vmem>>, vector<1x8x128xf32>
      %48 = vector.shape_cast %39 : vector<16x128xf32> to vector<2x8x128xf32>
      %cst_20 = arith.constant dense<0.000000e+00> : vector<8x128xf32>
      %49 = vector.multi_reduction <add>, %48, %cst_20 [0] : vector<2x8x128xf32> to vector<8x128xf32>
      %50 = vector.shape_cast %49 : vector<8x128xf32> to vector<1x8x128xf32>
      %51 = arith.addf %47, %50 : vector<1x8x128xf32>
      %c0_21 = arith.constant 0 : index
      %c0_22 = arith.constant 0 : index
      %c0_23 = arith.constant 0 : index
      %52 = vector.load %arg5[%c0_21, %c0_22, %c0_23] : memref<1x8x128xf32, #tpu.memory_space<vmem>>, vector<1x8x128xf32>
      tpu.vector_store %arg5[%c0_21, %c0_22, %c0_23], %51 {strides = array<i32>} : memref<1x8x128xf32, #tpu.memory_space<vmem>>, vector<1x8x128xf32>,
      %c0_24 = arith.constant 0 : index
      %c0_25 = arith.constant 0 : index
      %c0_26 = arith.constant 0 : index
      %53 = vector.load %arg6[%c0_24, %c0_25, %c0_26] : memref<1x8x128xf32, #tpu.memory_space<vmem>>, vector<1x8x128xf32>
      %54 = vector.shape_cast %43 : vector<16x128xf32> to vector<2x8x128xf32>
      %cst_27 = arith.constant dense<0.000000e+00> : vector<8x128xf32>
      %55 = vector.multi_reduction <add>, %54, %cst_27 [0] : vector<2x8x128xf32> to vector<8x128xf32>
      %56 = vector.shape_cast %55 : vector<8x128xf32> to vector<1x8x128xf32>
      %57 = arith.addf %53, %56 : vector<1x8x128xf32>
      %c0_28 = arith.constant 0 : index
      %c0_29 = arith.constant 0 : index
      %c0_30 = arith.constant 0 : index
      %58 = vector.load %arg6[%c0_28, %c0_29, %c0_30] : memref<1x8x128xf32, #tpu.memory_space<vmem>>, vector<1x8x128xf32>
      tpu.vector_store %arg6[%c0_28, %c0_29, %c0_30], %57 {strides = array<i32>} : memref<1x8x128xf32, #tpu.memory_space<vmem>>, vector<1x8x128xf32>,
      %c0_31 = arith.constant 0 : index
      %c0_32 = arith.constant 0 : index
      %c0_33 = arith.constant 0 : index
      %59 = vector.load %arg7[%c0_31, %c0_32, %c0_33] : memref<1x8x128xf32, #tpu.memory_space<vmem>>, vector<1x8x128xf32>
      %60 = vector.shape_cast %46 : vector<16x128xf32> to vector<2x8x128xf32>
      %cst_34 = arith.constant dense<0.000000e+00> : vector<8x128xf32>
      %61 = vector.multi_reduction <add>, %60, %cst_34 [0] : vector<2x8x128xf32> to vector<8x128xf32>
      %62 = vector.shape_cast %61 : vector<8x128xf32> to vector<1x8x128xf32>
      %63 = arith.addf %59, %62 : vector<1x8x128xf32>
      %c0_35 = arith.constant 0 : index
      %c0_36 = arith.constant 0 : index
      %c0_37 = arith.constant 0 : index
      %64 = vector.load %arg7[%c0_35, %c0_36, %c0_37] : memref<1x8x128xf32, #tpu.memory_space<vmem>>, vector<1x8x128xf32>
      tpu.vector_store %arg7[%c0_35, %c0_36, %c0_37], %63 {strides = array<i32>} : memref<1x8x128xf32, #tpu.memory_space<vmem>>, vector<1x8x128xf32>,
    } else {
    }
    return
  }
  func.func @transform_0(%arg0: i32, %arg1: i32, %arg2: memref<1xi32, #tpu.memory_space<smem>>) -> (i32, i32) {
    %c1_i32 = arith.constant 1 : i32
    %0 = arith.muli %arg0, %c1_i32 : i32
    %1 = arith.addi %0, %arg1 : i32
    %c0_i32 = arith.constant 0 : i32
    %2 = arith.minsi %1, %c0_i32 : i32
    %c0_i32_0 = arith.constant 0 : i32
    %c0_i32_1 = arith.constant 0 : i32
    return %2, %c0_i32_0 : i32, i32
  }
  func.func @transform_1(%arg0: i32, %arg1: i32, %arg2: memref<1xi32, #tpu.memory_space<smem>>) -> (i32, i32) {
    %c1_i32 = arith.constant 1 : i32
    %0 = arith.muli %arg0, %c1_i32 : i32
    %1 = arith.addi %0, %arg1 : i32
    %c0_i32 = arith.constant 0 : i32
    %2 = arith.minsi %1, %c0_i32 : i32
    %c0_i32_0 = arith.constant 0 : i32
    %c0_i32_1 = arith.constant 0 : i32
    return %2, %c0_i32_0 : i32, i32
  }
  func.func @transform_2(%arg0: i32, %arg1: i32, %arg2: memref<1xi32, #tpu.memory_space<smem>>) -> (i32, i32, i32) {
    %c0_i32 = arith.constant 0 : i32
    %c0_i32_0 = arith.constant 0 : i32
    %c0_i32_1 = arith.constant 0 : i32
    return %arg0, %c0_i32, %c0_i32_0 : i32, i32, i32
  }
  func.func @transform_3(%arg0: i32, %arg1: i32, %arg2: memref<1xi32, #tpu.memory_space<smem>>) -> (i32, i32, i32) {
    %c0_i32 = arith.constant 0 : i32
    %c0_i32_0 = arith.constant 0 : i32
    %c0_i32_1 = arith.constant 0 : i32
    return %arg0, %c0_i32, %c0_i32_0 : i32, i32, i32
  }
  func.func @transform_4(%arg0: i32, %arg1: i32, %arg2: memref<1xi32, #tpu.memory_space<smem>>) -> (i32, i32, i32) {
    %c0_i32 = arith.constant 0 : i32
    %c0_i32_0 = arith.constant 0 : i32
    %c0_i32_1 = arith.constant 0 : i32
    return %arg0, %c0_i32, %c0_i32_0 : i32, i32, i32
  }
}

</mosaic_0001>

<llo_original>
// kernel: tpu_custom_call.1
$region0: #{tpu_custom_call.1}
  #allocation0 [shape = 'u32[]', space=smem, size = 0x4, offset = 0x4, fixed_abs, tag = 'smem constant byte address 0x4 - core index']
  #allocation1 [shape = 'u32[144,128]{1,0:T(1,128)}', space=vmem, size = 0x12000, scoped, tag = 'internal scratch']
  #allocation2 [shape = 's32[1]{0}', space=sflag, size = 0x4, scoped, tag = 'scoped memory for tpu_custom_call.1']
  #allocation3 [shape = 's32[1]{0:T(128)S(6)}', space=smem, size = 0x200, scoped, tag = 'prefetched SMEM operand 0']
  %s0 = inlined_call_operand.<no memory space> [shape: s32[1], index: 0, kind: input, shape index: {}]
  %s1 = inlined_call_operand.hbm [shape: f32[16,128], index: 1, kind: input, shape index: {}]
  %s2 = inlined_call_operand.hbm [shape: f32[16,128], index: 2, kind: input, shape index: {}]
  %s3 = inlined_call_operand.hbm [shape: f32[1,8,128], index: 3, kind: output, shape index: {0}]
  %s4 = inlined_call_operand.hbm [shape: f32[1,8,128], index: 4, kind: output, shape index: {1}]
  %s5 = inlined_call_operand.hbm [shape: f32[1,8,128], index: 5, kind: output, shape index: {2}]
  %6 = xla_tuple %s3, %s4, %s5
  %s7 = sld [smem:[#allocation0]]
  $region54: #{tpu_custom_call.1} parent=0
    _
  %s9 = ssub.s32 1, %s7
  %s10 = scalar_select 0, %s9, %s7
  %11 = sst [smem:[#allocation3]] %s0
  $region1: #{tpu_custom_call.1} parent=0
    #allocation4 [shape = 'u8[8192]{0}', space=vmem, size = 0x2000, scoped, tag = 'input window, operand 1, single buffered']
    #allocation5 [shape = 's32[1]{0}', space=sflag, size = 0x4, scoped, tag = 'scoped memory for tpu_custom_call.1']
    #allocation6 [shape = 's32[1]{0}', space=sflag, size = 0x4, scoped, tag = 'scoped memory for tpu_custom_call.1']
    #allocation7 [shape = 'u8[8192]{0}', space=vmem, size = 0x2000, scoped, tag = 'input window, operand 2, single buffered']
    #allocation8 [shape = 's32[1]{0}', space=sflag, size = 0x4, scoped, tag = 'scoped memory for tpu_custom_call.1']
    #allocation9 [shape = 'u8[4096]{0}', space=vmem, size = 0x1000, scoped, tag = 'output window, operand 0, single buffered']
    #allocation10 [shape = 'u8[4096]{0}', space=vmem, size = 0x1000, scoped, tag = 'output window, operand 1, single buffered']
    #allocation11 [shape = 's32[1]{0}', space=sflag, size = 0x4, scoped, tag = 'scoped memory for tpu_custom_call.1']
    #allocation12 [shape = 'u8[4096]{0}', space=vmem, size = 0x1000, scoped, tag = 'output window, operand 2, single buffered']
    %12 = vsyncpa [#allocation5], 0
    %13 = vsyncpa [#allocation8], 0
    %14 = vsyncpa [#allocation6], 0
    %15 = vsyncpa [#allocation11], 0
    // Predicated region
    $region2: #{tpu_custom_call.1} parent=1 // pred_check
      _
    $region3: #{tpu_custom_call.1} parent=1 // pred_check_branch
      %17 = sbr.rel (0) target = $region5
    $region4: #{tpu_custom_call.1} parent=1 // pred_region
      %s18 = sadd.s32 0, 0
      %p19 = scmp.lt.s32.totalorder %s18, 0
      %s20 = scalar_select %p19, %s18, 0
      %s21 = smul.u32 2, %s20
      %s23 = ssub.s32 256, 256
      %24 = vsyncadd [#allocation5], %s23
      %s25 = smul.addr %s21, 128
      %s26 = scalar_lea.hbm %s1, %s25
      %s27 = sshll.u32 [#allocation4], 4
      %s28 = int_to_ptr.vmem [resolvable:$true] %s27
      %33 = dma.hbm_to_vmem [thread:$0]  %s26, 256, %s28, [#allocation5], 128, 128, 8
    $region5: #{tpu_custom_call.1} parent=1 // pred_fallthru
      _
    // Predicated region
    $region6: #{tpu_custom_call.1} parent=1 // pred_check
      _
    $region7: #{tpu_custom_call.1} parent=1 // pred_check_branch
      %35 = sbr.rel (0) target = $region9
    $region8: #{tpu_custom_call.1} parent=1 // pred_region
      %s36 = sadd.s32 0, 0
      %p37 = scmp.lt.s32.totalorder %s36, 0
      %s38 = scalar_select %p37, %s36, 0
      %s39 = smul.u32 2, %s38
      %s41 = ssub.s32 256, 256
      %42 = vsyncadd [#allocation8], %s41
      %s43 = smul.addr %s39, 128
      %s44 = scalar_lea.hbm %s2, %s43
      %s45 = sshll.u32 [#allocation7], 4
      %s46 = int_to_ptr.vmem [resolvable:$true] %s45
      %51 = dma.hbm_to_vmem [thread:$0]  %s44, 256, %s46, [#allocation8], 128, 128, 8
    $region9: #{tpu_custom_call.1} parent=1 // pred_fallthru
      _
    // Predicated region
    $region10: #{tpu_custom_call.1} parent=1 // pred_check
      _
    $region11: #{tpu_custom_call.1} parent=1 // pred_check_branch
      %53 = sbr.rel (0) target = $region13
    $region12: #{tpu_custom_call.1} parent=1 // pred_region
      %54 = dma.done [#allocation5], 256
    $region13: #{tpu_custom_call.1} parent=1 // pred_fallthru
      _
    // Predicated region
    $region14: #{tpu_custom_call.1} parent=1 // pred_check
      _
    $region15: #{tpu_custom_call.1} parent=1 // pred_check_branch
      %56 = sbr.rel (0) target = $region17
    $region16: #{tpu_custom_call.1} parent=1 // pred_region
      %57 = dma.done [#allocation8], 256
    $region17: #{tpu_custom_call.1} parent=1 // pred_fallthru
      _
    %s58 = sadd.s32 0, 0
    %p59 = scmp.lt.s32.totalorder %s58, 0
    %s60 = scalar_select %p59, %s58, 0
    %s61 = smul.u32 2, %s60
    %s62 = sadd.s32 0, 0
    %p63 = scmp.lt.s32.totalorder %s62, 0
    %s64 = scalar_select %p63, %s62, 0
    %s65 = smul.u32 2, %s64
    %p66 = scmp.eq.s32.totalorder 0, 0
    // Predicated region
    $region18: #{tpu_custom_call.1} parent=1 // pred_check
      %p67 = pneg %p66
    $region19: #{tpu_custom_call.1} parent=1 // pred_check_branch
      %69 = sbr.rel (%p67) target = $region21
    $region20: #{tpu_custom_call.1} parent=1 // pred_region
      %70 = vst [vmem:[#allocation9] sm:$0xff] 0.0
      %71 = vst [vmem:[#allocation10] sm:$0xff] 0.0
      %72 = vst [vmem:[#allocation12] sm:$0xff] 0.0
    $region21: #{tpu_custom_call.1} parent=1 // pred_fallthru
      _
    %s73 = sadd.s32 0, 0
    %s74 = smul.u32 %s73, 16
    %s75 = sld [smem:[#allocation3]]
    %s76 = ssub.s32 %s75, %s74
    %p77 = scmp.ge.s32.totalorder %s76, 16
    // Predicated region
    $region22: #{tpu_custom_call.1} parent=1 // pred_check
      %p78 = pneg %p77
    $region23: #{tpu_custom_call.1} parent=1 // pred_check_branch
      %80 = sbr.rel (%p78) target = $region25
    $region24: #{tpu_custom_call.1} parent=1 // pred_region
      %v81 = vld [vmem:[#allocation4] sm:$0xff]
      %v82 = vld [vmem:[#allocation4 + $0x8] sm:$0xff]
      %v83 = vld [vmem:[#allocation7] sm:$0xff]
      %v84 = vld [vmem:[#allocation7 + $0x8] sm:$0xff]
      %vm85 = vcmp.eq.f32.partialorder %v83, 1.0
      %vm86 = vcmp.eq.f32.partialorder %v84, 1.0
      %vm87 = vcmp.lt.f32.partialorder %v83, 1.0
      %vm88 = vcmp.lt.f32.partialorder %v84, 1.0
      %v89 = vsub.f32 1.0, %v81
      %v90 = vsub.f32 1.0, %v82
      %v91 = vsel %vm85, %v81, %v89
      %v92 = vsel %vm86, %v82, %v90
      %v93 = vlog2.pop %v91
      %v94 = vmul.f32 %v93, 0.6931472
      %v95 = vlog2.pop %v92
      %v96 = vmul.f32 %v95, 0.6931472
      %v97 = vmul.f32 %v81, %v81
      %v98 = vmul.f32 %v82, %v82
      %v99 = vmul.f32 %v89, %v89
      %v100 = vmul.f32 %v90, %v90
      %v101 = vsub.f32 1.0, %v83
      %v102 = vsub.f32 1.0, %v84
      %v103 = vmul.f32 %v101, %v101
      %v104 = vmul.f32 %v102, %v102
      %v105 = vmul.f32 %v103, %v103
      %v106 = vmul.f32 %v104, %v104
      %v107 = vmul.f32 %v94, %v99
      %v108 = vmul.f32 %v96, %v100
      %v109 = vsel %vm85, %v107, 0.0
      %v110 = vsel %vm86, %v108, 0.0
      %v111 = vmul.f32 %v94, %v97
      %v112 = vmul.f32 %v96, %v98
      %v113 = vmul.f32 %v111, %v105
      %v114 = vmul.f32 %v112, %v106
      %v115 = vsel %vm87, %v113, 0.0
      %v116 = vsel %vm88, %v114, 0.0
      %v117 = vsel %vm85, 1.0, 0.0
      %v118 = vsel %vm86, 1.0, 0.0
      %v119 = vld [vmem:[#allocation9] sm:$0xff]
      %v120 = vadd.f32 %v109, %v110
      %v121 = vadd.f32 %v119, %v120
      %122 = vst [vmem:[#allocation9] sm:$0xff] %v121
      %v123 = vld [vmem:[#allocation10] sm:$0xff]
      %v124 = vadd.f32 %v115, %v116
      %v125 = vadd.f32 %v123, %v124
      %126 = vst [vmem:[#allocation10] sm:$0xff] %v125
      %v127 = vld [vmem:[#allocation12] sm:$0xff]
      %v128 = vadd.f32 %v117, %v118
      %v129 = vadd.f32 %v127, %v128
      %130 = vst [vmem:[#allocation12] sm:$0xff] %v129
    $region25: #{tpu_custom_call.1} parent=1 // pred_fallthru
      _
    %p131 = scmp.gt.s32.totalorder %s76, 0
    %p132 = scmp.lt.s32.totalorder %s76, 16
    %p133 = pnand %p131, %p132
    %p134 = pneg %p133
    // Predicated region
    $region26: #{tpu_custom_call.1} parent=1 // pred_check
      _
    $region27: #{tpu_custom_call.1} parent=1 // pred_check_branch
      %136 = sbr.rel (%p133) target = $region29
    $region28: #{tpu_custom_call.1} parent=1 // pred_region
      %v137 = vlaneseq
      %v138 = vshrl.u32 %v137, 7
      %v139 = vadd.s32 %v138, 8
      %v140 = vstv %s76
      %vm141 = vcmp.lt.s32.totalorder %v138, %v140
      %vm142 = vcmp.lt.s32.totalorder %v139, %v140
      %v143 = vld [vmem:[#allocation4] sm:$0xff]
      %v144 = vld [vmem:[#allocation4 + $0x8] sm:$0xff]
      %v145 = vld [vmem:[#allocation7] sm:$0xff]
      %v146 = vld [vmem:[#allocation7 + $0x8] sm:$0xff]
      %vm147 = vcmp.eq.f32.partialorder %v145, 1.0
      %vm148 = vcmp.eq.f32.partialorder %v146, 1.0
      %vm149 = vcmp.lt.f32.partialorder %v145, 1.0
      %vm150 = vcmp.lt.f32.partialorder %v146, 1.0
      %vm151 = vmand %vm147, %vm141
      %vm152 = vmand %vm148, %vm142
      %vm153 = vmand %vm149, %vm141
      %vm154 = vmand %vm150, %vm142
      %v155 = vsub.f32 1.0, %v143
      %v156 = vsub.f32 1.0, %v144
      %v157 = vsel %vm151, %v143, %v155
      %v158 = vsel %vm152, %v144, %v156
      %v159 = vlog2.pop %v157
      %v160 = vmul.f32 %v159, 0.6931472
      %v161 = vlog2.pop %v158
      %v162 = vmul.f32 %v161, 0.6931472
      %v163 = vmul.f32 %v143, %v143
      %v164 = vmul.f32 %v144, %v144
      %v165 = vmul.f32 %v155, %v155
      %v166 = vmul.f32 %v156, %v156
      %v167 = vsub.f32 1.0, %v145
      %v168 = vsub.f32 1.0, %v146
      %v169 = vmul.f32 %v167, %v167
      %v170 = vmul.f32 %v168, %v168
      %v171 = vmul.f32 %v169, %v169
      %v172 = vmul.f32 %v170, %v170
      %v173 = vmul.f32 %v160, %v165
      %v174 = vmul.f32 %v162, %v166
      %v175 = vsel %vm151, %v173, 0.0
      %v176 = vsel %vm152, %v174, 0.0
      %v177 = vmul.f32 %v160, %v163
      %v178 = vmul.f32 %v162, %v164
      %v179 = vmul.f32 %v177, %v171
      %v180 = vmul.f32 %v178, %v172
      %v181 = vsel %vm153, %v179, 0.0
      %v182 = vsel %vm154, %v180, 0.0
      %v183 = vsel %vm151, 1.0, 0.0
      %v184 = vsel %vm152, 1.0, 0.0
      %v185 = vld [vmem:[#allocation9] sm:$0xff]
      %v186 = vadd.f32 %v175, %v176
      %v187 = vadd.f32 %v185, %v186
      %188 = vst [vmem:[#allocation9] sm:$0xff] %v187
      %v189 = vld [vmem:[#allocation10] sm:$0xff]
      %v190 = vadd.f32 %v181, %v182
      %v191 = vadd.f32 %v189, %v190
      %192 = vst [vmem:[#allocation10] sm:$0xff] %v191
      %v193 = vld [vmem:[#allocation12] sm:$0xff]
      %v194 = vadd.f32 %v183, %v184
      %v195 = vadd.f32 %v193, %v194
      %196 = vst [vmem:[#allocation12] sm:$0xff] %v195
    $region29: #{tpu_custom_call.1} parent=1 // pred_fallthru
      _
    // Predicated region
    $region30: #{tpu_custom_call.1} parent=1 // pred_check
      _
    $region31: #{tpu_custom_call.1} parent=1 // pred_check_branch
      %198 = sbr.rel (0) target = $region33
    $region32: #{tpu_custom_call.1} parent=1 // pred_region
      %s200 = ssub.s32 128, 128
      %201 = vsyncadd [#allocation6], %s200
      %s203 = sshll.u32 [#allocation9], 4
      %s204 = int_to_ptr.vmem [resolvable:$true] %s203
      %206 = dma.vmem_to_hbm [thread:$0]  %s204, 128, %s3, [#allocation6]
    $region33: #{tpu_custom_call.1} parent=1 // pred_fallthru
      _
    // Predicated region
    $region34: #{tpu_custom_call.1} parent=1 // pred_check
      _
    $region35: #{tpu_custom_call.1} parent=1 // pred_check_branch
      %208 = sbr.rel (0) target = $region37
    $region36: #{tpu_custom_call.1} parent=1 // pred_region
      %s210 = ssub.s32 128, 128
      %211 = vsyncadd [#allocation11], %s210
      %s213 = sshll.u32 [#allocation10], 4
      %s214 = int_to_ptr.vmem [resolvable:$true] %s213
      %216 = dma.vmem_to_hbm [thread:$0]  %s214, 128, %s4, [#allocation11]
    $region37: #{tpu_custom_call.1} parent=1 // pred_fallthru
      _
    // Predicated region
    $region38: #{tpu_custom_call.1} parent=1 // pred_check
      _
    $region39: #{tpu_custom_call.1} parent=1 // pred_check_branch
      %218 = sbr.rel (0) target = $region41
    $region40: #{tpu_custom_call.1} parent=1 // pred_region
      %s220 = ssub.s32 128, 128
      %221 = vsyncadd [#allocation11], %s220
      %s223 = sshll.u32 [#allocation12], 4
      %s224 = int_to_ptr.vmem [resolvable:$true] %s223
      %226 = dma.vmem_to_hbm [thread:$0]  %s224, 128, %s5, [#allocation11]
    $region41: #{tpu_custom_call.1} parent=1 // pred_fallthru
      _
    // Predicated region
    $region42: #{tpu_custom_call.1} parent=1 // pred_check
      _
    $region43: #{tpu_custom_call.1} parent=1 // pred_check_branch
      %228 = sbr.rel (0) target = $region45
    $region44: #{tpu_custom_call.1} parent=1 // pred_region
      %229 = dma.done [#allocation6], 128
    $region45: #{tpu_custom_call.1} parent=1 // pred_fallthru
      _
    // Predicated region
    $region46: #{tpu_custom_call.1} parent=1 // pred_check
      _
    $region47: #{tpu_custom_call.1} parent=1 // pred_check_branch
      %231 = sbr.rel (0) target = $region49
    $region48: #{tpu_custom_call.1} parent=1 // pred_region
      %232 = dma.done [#allocation11], 128
    $region49: #{tpu_custom_call.1} parent=1 // pred_fallthru
      _
    // Predicated region
    $region50: #{tpu_custom_call.1} parent=1 // pred_check
      _
    $region51: #{tpu_custom_call.1} parent=1 // pred_check_branch
      %234 = sbr.rel (0) target = $region53
    $region52: #{tpu_custom_call.1} parent=1 // pred_region
      %235 = dma.done [#allocation11], 128
    $region53: #{tpu_custom_call.1} parent=1 // pred_fallthru
      _
    %236 = vsyncpa [#allocation5], 1
    %237 = vsyncpa [#allocation8], 1
    %238 = vsyncpa [#allocation6], 1
    %239 = vsyncpa [#allocation11], 1

</llo_original>
